<compile_context>
chip_gen: v5e
topology: v5e:2x2
jax: 0.10.0
libtpu: 0.0.40
codegen_flags: <defaults>
</compile_context>

<pallas_src>
import functools

import jax
import jax.numpy as jnp
from jax.experimental import pallas as pl
from jax.experimental.pallas import tpu as pltpu


def _round_up(x, m):
    return (x + m - 1) // m * m


def _fusion_kernel(x_ref, w_ref, b_ref, o_ref, *, compute_dtype):
    """One batch tile x one N tile: (x @ W^T + b) -> ReLU, f32 accumulation."""
    x = x_ref[...].astype(compute_dtype)                    # f32 -> bf16 on the VPU
    acc = jnp.dot(x, w_ref[...], preferred_element_type=jnp.float32)
    acc = acc + b_ref[...]                                   # bias broadcast, f32
    o_ref[...] = jnp.maximum(acc, 0.0).astype(o_ref.dtype)
    # TODO(synk): training-mode dropout would need pltpu.prng_seed + pltpu.prng_random_bits
    # to build the keep-mask here; eval-mode nn.Dropout is identity so it is omitted.


def prepare_fusion_params(weight, bias, *, compute_dtype=jnp.bfloat16):
    """One-time parameter prep (do NOT redo per forward call).

    weight : [512, input_dim]  (PyTorch fc1.weight layout)
    bias   : [512]
    returns (w_t [input_dim, 512] compute_dtype, b2d [1, 512] float32)
    """
    w_t = jnp.asarray(weight).T.astype(compute_dtype)             # [K, N]
    b2d = jnp.asarray(bias).reshape(1, -1).astype(jnp.float32)    # [1, N]
    return w_t, b2d


def fusion_concat_forward(inputs, w_t, b2d, *, tile_m=1024, tile_n=256,
                          out_dtype=jnp.float32):
    """FusionConcat forward: cat(inputs, dim=1) -> Linear -> ReLU -> Dropout(identity).

    inputs : list of [B, feat_m] arrays (one per modality)
    w_t    : [K, N] pre-transposed weight (from prepare_fusion_params)
    b2d    : [1, N] bias
    returns {'features': [B, N] out_dtype}
    """
    # Concat the modalities once in the wrapper (tiny: B*K*4 bytes, ~3% of output traffic).
    x = jnp.concatenate([jnp.asarray(v) for v in inputs], axis=1)
    B, K = int(x.shape[0]), int(x.shape[1])
    Kw, N = int(w_t.shape[0]), int(w_t.shape[1])
    assert Kw == K, f"weight K={Kw} != concat K={K}"

    # Batch tiling: pick the number of batch tiles first, then size TM to it so B_pad - B
    # stays small for mid-size B (instead of padding B up to a fixed tile_m).
    n_bt = max(1, -(-B // tile_m))
    TM = _round_up(-(-B // n_bt), 8)
    B_pad = _round_up(B, TM)
    if B_pad != B:
        x = jnp.pad(x, ((0, B_pad - B), (0, 0)))

    # N tiling: lane-dense 256-wide tiles -> grid has >=2 parallel steps even for tiny B,
    # so both TensorCores on v7x get work.
    TN = tile_n if (N % tile_n == 0 and tile_n % 128 == 0) else N
    grid = (B_pad // TM, N // TN)

    in_specs = [
        pl.BlockSpec((TM, K), lambda i, j: (i, 0)),    # x batch tile (resident across j)
        pl.BlockSpec((K, TN), lambda i, j: (0, j)),    # weight N-slice (resident across i)
        pl.BlockSpec((1, TN), lambda i, j: (0, j)),    # bias N-slice
    ]
    out_spec = pl.BlockSpec((TM, TN), lambda i, j: (i, j))

    out_itemsize = jnp.dtype(out_dtype).itemsize
    bytes_accessed = (
        B_pad * K * x.dtype.itemsize
        + K * N * w_t.dtype.itemsize
        + N * 4
        + B_pad * N * out_itemsize
    )
    cost = pl.CostEstimate(flops=2 * B_pad * K * N,
                           transcendentals=0,
                           bytes_accessed=bytes_accessed)

    out = pl.pallas_call(
        functools.partial(_fusion_kernel, compute_dtype=w_t.dtype),
        out_shape=jax.ShapeDtypeStruct((B_pad, N), out_dtype),
        grid_spec=pl.GridSpec(grid=grid, in_specs=in_specs, out_specs=out_spec),
        compiler_params=pltpu.CompilerParams(
            dimension_semantics=("parallel", "parallel"),
            vmem_limit_bytes=32 * 1024 * 1024,   # explicit budget; actual use is a few MB
        ),
        cost_estimate=cost,
    )(x, w_t, b2d)

    if B_pad != B:
        out = out[:B]
    return {"features": out}


if __name__ == "__main__":
    # Module config: feature_dim=32, modality=('rgb','flow') -> input_dim=64, out=512
    feature_dim = 32
    modality = ("rgb", "flow")
    input_dim = len(modality) * feature_dim
    out_dim = 512
    batch = 4

    key = jax.random.PRNGKey(0)
    k_w, k_b, k_rgb, k_flow = jax.random.split(key, 4)

    # fc1.weight ~ Normal(0, 0.001) matches the module init.  The module inits the bias to 0;
    # a small nonzero bias is used here so the bias-broadcast path is actually validated.
    w = jax.random.normal(k_w, (out_dim, input_dim), dtype=jnp.float32) * 0.001
    b = jax.random.normal(k_b, (out_dim,), dtype=jnp.float32) * 0.01

    x_rgb = jax.random.normal(k_rgb, (batch, feature_dim), dtype=jnp.float32)
    x_flow = jax.random.normal(k_flow, (batch, feature_dim), dtype=jnp.float32)

    # One-time parameter prep (transpose + bf16 cast), then the forward call.
    w_t, b2d = prepare_fusion_params(w, b)
    out = fusion_concat_forward([x_rgb, x_flow], w_t, b2d)
    feats = jax.block_until_ready(out["features"])

    # Plain-JAX f32 reference; the kernel uses bf16 MXU inputs with f32 accumulation,
    # so compare with a tolerance that covers bf16 input rounding.
    x_cat = jnp.concatenate([x_rgb, x_flow], axis=1)
    ref = jnp.maximum(x_cat @ w.T + b, 0.0)
    assert feats.shape == (batch, out_dim)
    assert feats.dtype == jnp.float32
    assert jnp.allclose(feats, ref, rtol=2e-2, atol=1e-4), "mismatch vs reference"
    print("KERNEL_OK")
</pallas_src>

<mosaic_0001>
module attributes {stable_mosaic.version = 11 : i64} {
  func.func @_fusion_kernel(%arg0: i32, %arg1: i32, %arg2: memref<8x64xf32, #tpu.memory_space<vmem>>, %arg3: memref<64x256xbf16, #tpu.memory_space<vmem>>, %arg4: memref<1x256xf32, #tpu.memory_space<vmem>>, %arg5: memref<8x256xf32, #tpu.memory_space<vmem>>) attributes {dimension_semantics = [#tpu.dimension_semantics<parallel>, #tpu.dimension_semantics<parallel>], iteration_bounds = array<i64: 1, 2>, scalar_prefetch = 0 : i64, scratch_operands = 0 : i64, tpu.core_type = #tpu.core_type<tc>, window_params = [{transform_indices = @transform_0, window_bounds = array<i64: 8, 64>}, {transform_indices = @transform_1, window_bounds = array<i64: 64, 256>}, {transform_indices = @transform_2, window_bounds = array<i64: 1, 256>}, {transform_indices = @transform_3, window_bounds = array<i64: 8, 256>}]} {
    %c0 = arith.constant 0 : index
    %c0_0 = arith.constant 0 : index
    %0 = vector.load %arg2[%c0, %c0_0] : memref<8x64xf32, #tpu.memory_space<vmem>>, vector<8x64xf32>
    %1 = arith.truncf %0 : vector<8x64xf32> to vector<8x64xbf16>
    %c0_1 = arith.constant 0 : index
    %c0_2 = arith.constant 0 : index
    %2 = vector.load %arg3[%c0_1, %c0_2] : memref<64x256xbf16, #tpu.memory_space<vmem>>, vector<64x256xbf16>
    %cst = arith.constant dense<0.000000e+00> : vector<8x256xf32>
    %3 = tpu.matmul %1, %2, %cst {dimension_numbers = #tpu.dot_dimension_numbers<[1], [0], [0], [1], [0, 0, 1, 1], [], []>} : vector<8x64xbf16>, vector<64x256xbf16>, vector<8x256xf32> -> vector<8x256xf32>
    %c0_3 = arith.constant 0 : index
    %c0_4 = arith.constant 0 : index
    %4 = vector.load %arg4[%c0_3, %c0_4] : memref<1x256xf32, #tpu.memory_space<vmem>>, vector<1x256xf32>
    %5 = vector.broadcast %4 : vector<1x256xf32> to vector<8x256xf32>
    %6 = arith.addf %3, %5 : vector<8x256xf32>
    %cst_5 = arith.constant 0.000000e+00 : f32
    %7 = vector.broadcast %cst_5 : f32 to vector<8x256xf32>
    %8 = arith.maximumf %6, %7 : vector<8x256xf32>
    %c0_6 = arith.constant 0 : index
    %c0_7 = arith.constant 0 : index
    %9 = vector.load %arg5[%c0_6, %c0_7] : memref<8x256xf32, #tpu.memory_space<vmem>>, vector<8x256xf32>
    tpu.vector_store %arg5[%c0_6, %c0_7], %8 {strides = array<i32>} : memref<8x256xf32, #tpu.memory_space<vmem>>, vector<8x256xf32>,
    return
  }
  func.func @transform_0(%arg0: i32, %arg1: i32) -> (i32, i32) {
    %c0_i32 = arith.constant 0 : i32
    %c0_i32_0 = arith.constant 0 : i32
    return %arg0, %c0_i32 : i32, i32
  }
  func.func @transform_1(%arg0: i32, %arg1: i32) -> (i32, i32) {
    %c0_i32 = arith.constant 0 : i32
    %c0_i32_0 = arith.constant 0 : i32
    return %c0_i32, %arg1 : i32, i32
  }
  func.func @transform_2(%arg0: i32, %arg1: i32) -> (i32, i32) {
    %c0_i32 = arith.constant 0 : i32
    %c0_i32_0 = arith.constant 0 : i32
    return %c0_i32, %arg1 : i32, i32
  }
  func.func @transform_3(%arg0: i32, %arg1: i32) -> (i32, i32) {
    %c0_i32 = arith.constant 0 : i32
    return %arg0, %arg1 : i32, i32
  }
}

</mosaic_0001>

<llo_original>
// kernel: tpu_custom_call.1
$region0: #{tpu_custom_call.1}
  #allocation0 [shape = 'u32[]', space=smem, size = 0x4, offset = 0x4, fixed_abs, tag = 'smem constant byte address 0x4 - core index']
  #allocation1 [shape = 'u32[72,128]{1,0:T(1,128)}', space=vmem, size = 0x9000, scoped, tag = 'internal scratch']
  %s0 = inlined_call_operand.hbm [shape: f32[8,64], index: 0, kind: input, shape index: {}]
  %s1 = inlined_call_operand.hbm [shape: bf16[64,512], index: 1, kind: input, shape index: {}]
  %s2 = inlined_call_operand.hbm [shape: f32[1,512], index: 2, kind: input, shape index: {}]
  %s3 = inlined_call_operand.hbm [shape: f32[8,512], index: 3, kind: output, shape index: {}]
  %s4 = sld [smem:[#allocation0]]
  $region57: #{tpu_custom_call.1} parent=0
    _
  %s6 = ssub.s32 1, %s4
  %s7 = scalar_select 0, %s6, %s4
  $region1: #{tpu_custom_call.1} parent=0
    #allocation2 [shape = 'u8[4096]{0}', space=vmem, size = 0x1000, scoped, tag = 'input window, operand 0, single buffered']
    #allocation3 [shape = 's32[2]{0}', space=sflag, size = 0x8, scoped, tag = 'scoped memory for tpu_custom_call.1']
    #allocation4 [shape = 's32[2]{0}', space=sflag, size = 0x8, scoped, tag = 'scoped memory for tpu_custom_call.1']
    #allocation5 [shape = 'u8[65536]{0}', space=vmem, size = 0x10000, scoped, tag = 'input window, operand 1']
    #allocation6 [shape = 's32[2]{0}', space=sflag, size = 0x8, scoped, tag = 'scoped memory for tpu_custom_call.1']
    #allocation7 [shape = 'u8[2048]{0}', space=vmem, size = 0x800, scoped, tag = 'input window, operand 2']
    #allocation8 [shape = 'u8[16384]{0}', space=vmem, size = 0x4000, scoped, tag = 'output window, operand 0']
    %8 = vsyncpa [#allocation3], 0
    %9 = vsyncpa [#allocation6], 0
    %s10 = scalar_lea.sflag [#allocation6], 1
    %11 = vsyncpa %s10, 0
    %12 = vsyncpa [#allocation4], 0
    %s13 = scalar_lea.sflag [#allocation4], 1
    %14 = vsyncpa %s13, 0
    loop: start=0, step=1, limit=4
    $region2: #{tpu_custom_call.1} parent=1 // loop_pre_header
      _
    $region3: #{tpu_custom_call.1} parent=1 // loop_header
      %s16 = sphi 0, %s20
      %p17 = scmp.ge.s32.totalorder %s16, 4
      %s23 = sphi 0, %s35
      %s24 = sphi 0, %s31
      %s25 = sphi 0, %s23
      %s26 = sphi 0, %s24
      %s27 = sphi 0, %s25
      %s28 = sphi 0, %s26
      %s38 = sphi 0, %s40
      %s41 = sphi 0, %s38
      %s42 = sphi 0, %s41
      %s58 = sphi 0, %s42
      %s64 = sphi 0, %s66
      %s67 = sphi 0, %s64
      %s68 = sphi 0, %s67
      %s84 = sphi 0, %s68
      %s90 = sphi 0, %s92
      %s93 = sphi 0, %s90
      %s94 = sphi 0, %s93
      %s110 = sphi 0, %s94
      %s118 = sphi 0, %s120
      %s121 = sphi 0, %s118
      %s122 = sphi 0, %s121
      %s138 = sphi 0, %s122
    $region4: #{tpu_custom_call.1} parent=1 // loop_header_branch
      %19 = sbr.rel (%p17) target = $region8
    $region5: #{tpu_custom_call.1} parent=1 // loop_body
      %s21 = ssub.s32 %s16, 1
      %s22 = ssub.s32 %s16, 2
      %s29 = sadd.s32 1, %s24
      %p30 = scmp.ge.s32.totalorder %s29, 2
      %s31 = scalar_select %p30, 0, %s29
      %s32 = sadd.s32 1, %s23
      %s33 = scalar_select %p30, %s32, %s23
      %p34 = scmp.ge.s32.totalorder %s33, 1
      %s35 = scalar_select %p34, 0, %s33
      %s36 = ssub.s32 %s23, %s35
      %p37 = scmp.eq.s32.totalorder %s36, 0
      %s39 = sadd.s32 %s38, 1
      %s40 = scalar_select %p37, %s38, %s39
      %p43 = pneg %p37
      %p44 = scmp.eq.s32.totalorder %s16, 1
      %p45 = por %p43, %p44
      %p46 = scmp.ne.s32.totalorder %s38, %s41
      %p47 = scmp.eq.s32.totalorder %s16, 0
      %p48 = por %p46, %p47
      %p49 = scmp.ne.s32.totalorder %s38, %s41
      %p50 = scmp.eq.s32.totalorder %s21, 1
      %p51 = por %p49, %p50
      %p52 = scmp.ne.s32.totalorder %s41, %s42
      %p53 = scmp.eq.s32.totalorder %s21, 0
      %p54 = por %p52, %p53
      %p55 = scmp.ne.s32.totalorder %s41, %s42
      %p56 = scmp.eq.s32.totalorder %s22, 1
      %p57 = por %p55, %p56
      %p59 = scmp.ne.s32.totalorder %s42, %s58
      %p60 = scmp.eq.s32.totalorder %s22, 0
      %p61 = por %p59, %p60
      %s62 = ssub.s32 %s24, %s31
      %p63 = scmp.eq.s32.totalorder %s62, 0
      %s65 = sadd.s32 %s64, 1
      %s66 = scalar_select %p63, %s64, %s65
      %p69 = pneg %p63
      %p70 = scmp.eq.s32.totalorder %s16, 1
      %p71 = por %p69, %p70
      %p72 = scmp.ne.s32.totalorder %s64, %s67
      %p73 = scmp.eq.s32.totalorder %s16, 0
      %p74 = por %p72, %p73
      %p75 = scmp.ne.s32.totalorder %s64, %s67
      %p76 = scmp.eq.s32.totalorder %s21, 1
      %p77 = por %p75, %p76
      %p78 = scmp.ne.s32.totalorder %s67, %s68
      %p79 = scmp.eq.s32.totalorder %s21, 0
      %p80 = por %p78, %p79
      %p81 = scmp.ne.s32.totalorder %s67, %s68
      %p82 = scmp.eq.s32.totalorder %s22, 1
      %p83 = por %p81, %p82
      %p85 = scmp.ne.s32.totalorder %s68, %s84
      %p86 = scmp.eq.s32.totalorder %s22, 0
      %p87 = por %p85, %p86
      %s88 = ssub.s32 %s24, %s31
      %p89 = scmp.eq.s32.totalorder %s88, 0
      %s91 = sadd.s32 %s90, 1
      %s92 = scalar_select %p89, %s90, %s91
      %p95 = pneg %p89
      %p96 = scmp.eq.s32.totalorder %s16, 1
      %p97 = por %p95, %p96
      %p98 = scmp.ne.s32.totalorder %s90, %s93
      %p99 = scmp.eq.s32.totalorder %s16, 0
      %p100 = por %p98, %p99
      %p101 = scmp.ne.s32.totalorder %s90, %s93
      %p102 = scmp.eq.s32.totalorder %s21, 1
      %p103 = por %p101, %p102
      %p104 = scmp.ne.s32.totalorder %s93, %s94
      %p105 = scmp.eq.s32.totalorder %s21, 0
      %p106 = por %p104, %p105
      %p107 = scmp.ne.s32.totalorder %s93, %s94
      %p108 = scmp.eq.s32.totalorder %s22, 1
      %p109 = por %p107, %p108
      %p111 = scmp.ne.s32.totalorder %s94, %s110
      %p112 = scmp.eq.s32.totalorder %s22, 0
      %p113 = por %p111, %p112
      %s114 = ssub.s32 %s23, %s35
      %s115 = ssub.s32 %s24, %s31
      %s116 = sor.u32 %s114, %s115
      %p117 = scmp.eq.s32.totalorder %s116, 0
      %s119 = sadd.s32 %s118, 1
      %s120 = scalar_select %p117, %s118, %s119
      %p123 = pneg %p117
      %p124 = scmp.eq.s32.totalorder %s16, 1
      %p125 = por %p123, %p124
      %p126 = scmp.ne.s32.totalorder %s118, %s121
      %p127 = scmp.eq.s32.totalorder %s16, 0
      %p128 = por %p126, %p127
      %p129 = scmp.ne.s32.totalorder %s118, %s121
      %p130 = scmp.eq.s32.totalorder %s21, 1
      %p131 = por %p129, %p130
      %p132 = scmp.ne.s32.totalorder %s121, %s122
      %p133 = scmp.eq.s32.totalorder %s21, 0
      %p134 = por %p132, %p133
      %p135 = scmp.ne.s32.totalorder %s121, %s122
      %p136 = scmp.eq.s32.totalorder %s22, 1
      %p137 = por %p135, %p136
      %p139 = scmp.ne.s32.totalorder %s122, %s138
      %p140 = scmp.eq.s32.totalorder %s22, 0
      %p141 = por %p139, %p140
      %p142 = scmp.le.s32.totalorder 1, %s16
      %p143 = scmp.lt.s32.totalorder %s16, 3
      %p144 = pnand %p142, %p143
      %p145 = pneg %p144
      // Predicated region
      $region9: #{tpu_custom_call.1} parent=5 // pred_check
        _
      $region10: #{tpu_custom_call.1} parent=5 // pred_check_branch
        %147 = sbr.rel (%p144) target = $region12
      $region11: #{tpu_custom_call.1} parent=5 // pred_region
        %s148 = ssub.s32 %s16, 1
        // Predicated region
        $region13: #{tpu_custom_call.1} parent=11 // pred_check
          %p149 = pneg %p54
        $region14: #{tpu_custom_call.1} parent=11 // pred_check_branch
          %151 = sbr.rel (%p149) target = $region16
        $region15: #{tpu_custom_call.1} parent=11 // pred_region
          %153 = vsyncadd [#allocation3], 0
          %s154 = smul.addr %s25, 8
          %s155 = scalar_lea.hbm %s0, %s154
          %s157 = sshll.u32 %s155, 4
          %s158 = int_to_ptr.hbm [resolvable:$true] %s157
          %s159 = sshll.u32 [#allocation2], 4
          %s160 = int_to_ptr.vmem [resolvable:$true] %s159
          %162 = dma.hbm_to_vmem [thread:$0]  %s158, 128, %s160, [#allocation3]
        $region16: #{tpu_custom_call.1} parent=11 // pred_fallthru
          _
      $region12: #{tpu_custom_call.1} parent=5 // pred_fallthru
        _
      %p163 = scmp.lt.s32.totalorder %s16, 2
      // Predicated region
      $region17: #{tpu_custom_call.1} parent=5 // pred_check
        %p164 = pneg %p163
      $region18: #{tpu_custom_call.1} parent=5 // pred_check_branch
        %166 = sbr.rel (%p164) target = $region20
      $region19: #{tpu_custom_call.1} parent=5 // pred_region
        // Predicated region
        $region21: #{tpu_custom_call.1} parent=19 // pred_check
          %p167 = pneg %p74
        $region22: #{tpu_custom_call.1} parent=19 // pred_check_branch
          %169 = sbr.rel (%p167) target = $region24
        $region23: #{tpu_custom_call.1} parent=19 // pred_region
          %s170 = sand.u32 %s16, 1
          %s171 = scalar_lea.sflag [#allocation6], %s170
          %s172 = sand.u32 %s64, 1
          %s173 = smul.addr %s172, 64
          %s174 = scalar_lea.vmem [#allocation5], %s173
          %s175 = smul.u32 2, %s24
          %177 = vsyncadd %s171, 0
          %s178 = smul.addr %s175, 4
          %s179 = scalar_lea.hbm %s1, %s178
          %s180 = sshll.u32 %s179, 4
          %s181 = int_to_ptr.hbm [resolvable:$true] %s180
          %s182 = sshll.u32 %s174, 4
          %s183 = int_to_ptr.vmem [resolvable:$true] %s182
          %188 = dma.hbm_to_vmem [thread:$0]  %s181, 1024, %s183, %s171, 256, 128, 8
        $region24: #{tpu_custom_call.1} parent=19 // pred_fallthru
          _
        // Predicated region
        $region25: #{tpu_custom_call.1} parent=19 // pred_check
          %p189 = pneg %p100
        $region26: #{tpu_custom_call.1} parent=19 // pred_check_branch
          %191 = sbr.rel (%p189) target = $region28
        $region27: #{tpu_custom_call.1} parent=19 // pred_region
          %s192 = sand.u32 %s16, 1
          %s193 = scalar_lea.sflag [#allocation6], %s192
          %s194 = sand.u32 %s90, 1
          %s195 = smul.addr %s194, 2
          %s196 = scalar_lea.vmem [#allocation7], %s195
          %s197 = smul.u32 2, %s24
          %199 = vsyncadd %s193, 0
          %s200 = scalar_lea.hbm %s2, %s197
          %s202 = sshll.u32 %s200, 4
          %s203 = int_to_ptr.hbm [resolvable:$true] %s202
          %s204 = sshll.u32 %s196, 4
          %s205 = int_to_ptr.vmem [resolvable:$true] %s204
          %207 = dma.hbm_to_vmem [thread:$0]  %s203, 32, %s205, %s193
        $region28: #{tpu_custom_call.1} parent=19 // pred_fallthru
          _
      $region20: #{tpu_custom_call.1} parent=5 // pred_fallthru
        _
      %p208 = scmp.le.s32.totalorder 1, %s16
      %p209 = scmp.lt.s32.totalorder %s16, 3
      %p210 = pnand %p208, %p209
      %p211 = pneg %p210
      // Predicated region
      $region29: #{tpu_custom_call.1} parent=5 // pred_check
        _
      $region30: #{tpu_custom_call.1} parent=5 // pred_check_branch
        %213 = sbr.rel (%p210) target = $region32
      $region31: #{tpu_custom_call.1} parent=5 // pred_region
        %s214 = ssub.s32 %s16, 1
        // Predicated region
        $region33: #{tpu_custom_call.1} parent=31 // pred_check
          %p215 = pneg %p54
        $region34: #{tpu_custom_call.1} parent=31 // pred_check_branch
          %217 = sbr.rel (%p215) target = $region36
        $region35: #{tpu_custom_call.1} parent=31 // pred_region
          %219 = dma.done [#allocation3], 128
        $region36: #{tpu_custom_call.1} parent=31 // pred_fallthru
          _
        %s220 = sand.u32 %s21, 1
        %s221 = scalar_lea.sflag [#allocation6], %s220
        %s222 = sand.u32 %s67, 1
        %s223 = smul.addr %s222, 64
        %s224 = scalar_lea.vmem [#allocation5], %s223
        // Predicated region
        $region37: #{tpu_custom_call.1} parent=31 // pred_check
          %p225 = pneg %p80
        $region38: #{tpu_custom_call.1} parent=31 // pred_check_branch
          %227 = sbr.rel (%p225) target = $region40
        $region39: #{tpu_custom_call.1} parent=31 // pred_region
          %229 = dma.done %s221, 1024
        $region40: #{tpu_custom_call.1} parent=31 // pred_fallthru
          _
        %s230 = sand.u32 %s21, 1
        %s231 = scalar_lea.sflag [#allocation6], %s230
        %s232 = sand.u32 %s93, 1
        %s233 = smul.addr %s232, 2
        %s234 = scalar_lea.vmem [#allocation7], %s233
        // Predicated region
        $region41: #{tpu_custom_call.1} parent=31 // pred_check
          %p235 = pneg %p106
        $region42: #{tpu_custom_call.1} parent=31 // pred_check_branch
          %237 = sbr.rel (%p235) target = $region44
        $region43: #{tpu_custom_call.1} parent=31 // pred_region
          %239 = dma.done %s231, 32
        $region44: #{tpu_custom_call.1} parent=31 // pred_fallthru
          _
        %p240 = pneg %p54
        %p241 = pneg %p51
        %s242 = sand.u32 %s21, 1
        %s243 = scalar_lea.sflag [#allocation6], %s242
        %s244 = sand.u32 %s67, 1
        %s245 = smul.addr %s244, 64
        %s246 = scalar_lea.vmem [#allocation5], %s245
        %p247 = pneg %p80
        %p248 = pneg %p77
        %s249 = sand.u32 %s21, 1
        %s250 = scalar_lea.sflag [#allocation6], %s249
        %s251 = sand.u32 %s93, 1
        %s252 = smul.addr %s251, 2
        %s253 = scalar_lea.vmem [#allocation7], %s252
        %p254 = pneg %p106
        %p255 = pneg %p103
        %p256 = pneg %p134
        %p257 = pneg %p131
        %s258 = sand.u32 %s121, 1
        %s259 = scalar_lea.sflag [#allocation4], %s258
        %s260 = sand.u32 %s121, 1
        %s261 = smul.addr %s260, 16
        %s262 = scalar_lea.vmem [#allocation8], %s261
        %s263 = smul.u32 2, %s26
        %s264 = smul.u32 2, %s26
        %s265 = smul.u32 2, %s26
        %v267 = vld [vmem:[#allocation2] sm:$0xff]
        %v268 = vpack.c.bf16 %v267, %v267
        %v269 = vld [vmem:[%s224] sm:$0xff]
        %v270 = vld [vmem:[%s224 + $0x8] sm:$0xff]
        %v271 = vld [vmem:[%s224 + $0x10] sm:$0xff]
        %v272 = vld [vmem:[%s224 + $0x18] sm:$0xff]
        %v273 = vld [vmem:[%s224 + $0x20] sm:$0xff]
        %v274 = vld [vmem:[%s224 + $0x28] sm:$0xff]
        %v275 = vld [vmem:[%s224 + $0x30] sm:$0xff]
        %v276 = vld [vmem:[%s224 + $0x38] sm:$0xff]
        %v277 = vld [vmem:[%s234] sm:$0x3]
        %v279 = vperm.slane %v277, 0
        %v280 = vperm.slane %v277, 1
        %v291 = vunpack.c.l.b16 %v269
        %v292 = vunpack.c.h.b16 %v269
        %v293 = vunpack.c.l.b16 %v270
        %v294 = vunpack.c.h.b16 %v270
        %v295 = vunpack.c.l.b16 %v271
        %v296 = vunpack.c.h.b16 %v271
        %v297 = vunpack.c.l.b16 %v272
        %v298 = vunpack.c.h.b16 %v272
        %v299 = vunpack.c.l.b16 %v273
        %v300 = vunpack.c.h.b16 %v273
        %v301 = vunpack.c.l.b16 %v274
        %v302 = vunpack.c.h.b16 %v274
        %v303 = vunpack.c.l.b16 %v275
        %v304 = vunpack.c.h.b16 %v275
        %v305 = vunpack.c.l.b16 %v276
        %v306 = vunpack.c.h.b16 %v276
        %v307 = vpack.c.b16 %v293, %v291
        %v308 = vpack.c.b16 %v294, %v292
        %v309 = vpack.c.b16 %v297, %v295
        %v310 = vpack.c.b16 %v298, %v296
        %v311 = vpack.c.b16 %v301, %v299
        %v312 = vpack.c.b16 %v302, %v300
        %v313 = vpack.c.b16 %v305, %v303
        %v314 = vpack.c.b16 %v306, %v304
        %vm323 = vcmask 523264
        %v325 = vsel %vm323, %v268, 0
        %327 = vmatpush.bf16.msra.mxu0 0
        %328 = vmatpush.bf16.msra.mxu0 0
        %329 = vmatpush.bf16.msra.mxu0 0
        %330 = vmatpush.bf16.msra.mxu0 0
        %331 = vmatpush.bf16.msra.mxu0 %v313
        %332 = vmatpush.bf16.msra.mxu0 %v311
        %333 = vmatpush.bf16.msra.mxu0 %v309
        %334 = vmatpush.bf16.msra.mxu0 %v307
        %335 = vmatmul.bf16.gmra.mxu0 %v325
        %v336 = vpop.f32.mrf.mxu0
        %v337 = vadd.f32 %v279, %v336
        %v338 = vpop.f32.mrf.mxu0
        %339 = vdwg.mxu0
        %340 = vmatpush.bf16.msra.mxu0 0
        %341 = vmatpush.bf16.msra.mxu0 0
        %342 = vmatpush.bf16.msra.mxu0 0
        %343 = vmatpush.bf16.msra.mxu0 0
        %344 = vmatpush.bf16.msra.mxu0 %v314
        %345 = vmatpush.bf16.msra.mxu0 %v312
        %346 = vmatpush.bf16.msra.mxu0 %v310
        %347 = vmatpush.bf16.msra.mxu0 %v308
        %348 = vmatmul.bf16.gmra.mxu0 %v325
        %v349 = vpop.f32.mrf.mxu0
        %v350 = vadd.f32 %v280, %v349
        %v351 = vpop.f32.mrf.mxu0
        %352 = vdwg.mxu0
        %v353 = vmax.f32 %v337, 0.0
        %v354 = vmax.f32 %v350, 0.0
        %355 = vst [vmem:[%s262] sm:$0xff] %v353
        %356 = vst [vmem:[%s262 + $0x8] sm:$0xff] %v354
        %s357 = sand.u32 %s121, 1
        %s358 = scalar_lea.sflag [#allocation4], %s357
        %s359 = sand.u32 %s121, 1
        %s360 = smul.addr %s359, 16
        %s361 = scalar_lea.vmem [#allocation8], %s360
        // Predicated region
        $region45: #{tpu_custom_call.1} parent=31 // pred_check
          %p362 = pneg %p131
        $region46: #{tpu_custom_call.1} parent=31 // pred_check_branch
          %364 = sbr.rel (%p362) target = $region48
        $region47: #{tpu_custom_call.1} parent=31 // pred_region
          %s365 = smul.u32 2, %s26
          %367 = vsyncadd %s358, 0
          %s368 = smul.addr %s25, 4
          %s369 = sadd.s32 %s365, %s368
          %s370 = smul.addr %s369, 8
          %s371 = scalar_lea.hbm %s3, %s370
          %s373 = sshll.u32 %s361, 4
          %s374 = int_to_ptr.vmem [resolvable:$true] %s373
          %s375 = sshll.u32 %s371, 4
          %s376 = int_to_ptr.hbm [resolvable:$true] %s375
          %378 = dma.vmem_to_hbm [thread:$0]  %s374, 256, %s376, %s358
        $region48: #{tpu_custom_call.1} parent=31 // pred_fallthru
          _
      $region32: #{tpu_custom_call.1} parent=5 // pred_fallthru
        _
      %p379 = scmp.le.s32.totalorder 2, %s16
      // Predicated region
      $region49: #{tpu_custom_call.1} parent=5 // pred_check
        %p380 = pneg %p379
      $region50: #{tpu_custom_call.1} parent=5 // pred_check_branch
        %382 = sbr.rel (%p380) target = $region52
      $region51: #{tpu_custom_call.1} parent=5 // pred_region
        %s383 = ssub.s32 %s16, 2
        // Predicated region
        $region53: #{tpu_custom_call.1} parent=51 // pred_check
          %p384 = pneg %p137
        $region54: #{tpu_custom_call.1} parent=51 // pred_check_branch
          %386 = sbr.rel (%p384) target = $region56
        $region55: #{tpu_custom_call.1} parent=51 // pred_region
          %s387 = sand.u32 %s122, 1
          %s388 = scalar_lea.sflag [#allocation4], %s387
          %s389 = sand.u32 %s122, 1
          %s390 = smul.addr %s389, 16
          %s391 = scalar_lea.vmem [#allocation8], %s390
          %393 = dma.done %s388, 256
        $region56: #{tpu_custom_call.1} parent=51 // pred_fallthru
          _
      $region52: #{tpu_custom_call.1} parent=5 // pred_fallthru
        _
    $region6: #{tpu_custom_call.1} parent=1 // loop_footer
      %s20 = sadd.s32 1, %s16
    $region7: #{tpu_custom_call.1} parent=1 // loop_footer_branch
      %15 = sbr.rel target = $region3
    $region8: #{tpu_custom_call.1} parent=1 // loop_exit
      _
    %394 = vsyncpa [#allocation3], 1
    %s395 = scalar_lea.sflag [#allocation3], 1
    %396 = vsyncpa %s395, 1
    %397 = vsyncpa [#allocation6], 1
    %s398 = scalar_lea.sflag [#allocation6], 1
    %399 = vsyncpa %s398, 1
    %400 = vsyncpa [#allocation4], 1
    %s401 = scalar_lea.sflag [#allocation4], 1
    %402 = vsyncpa %s401, 1

</llo_original>
